<compile_context>
chip_gen: v5e
topology: v5e:2x2
jax: 0.10.0
libtpu: 0.0.40
codegen_flags: <defaults>
</compile_context>

<pallas_src>
import math

import jax
import jax.numpy as jnp
from jax.experimental import pallas as pl
from jax.experimental.pallas import tpu as pltpu


# ----------------------------------------------------------------------------
# Fused kernel: attention -> context -> GRU step -> out Linear -> fc + softmax
# ----------------------------------------------------------------------------
def _decoder_kernel(h0_ref, enc_ref, enc_t_ref, inp_ref,
                    wa_dec_ref, wa_enc_ref, b_attn_ref,
                    w_ih_a_ref, w_ih_i_ref, w_hh_ref, b_ih_ref, b_hh_ref,
                    w_out_ref, b_out_ref, w_fc_ref, b_fc_ref,
                    probs_ref, attn_ref):
    f32 = jnp.float32
    h0 = h0_ref[...]                 # (B, H)   decoder hidden state
    inp = inp_ref[...]               # (B, H)   "input" fed to the GRU
    B = h0.shape[0]

    # --- attention scores: s[b, t] = wa_dec . h0[b] + wa_enc . enc[b, t] + b_attn
    s_dec = jnp.sum(h0 * wa_dec_ref[...], axis=-1, keepdims=True)          # (B, 1)
    wa_enc = wa_enc_ref[...]                                               # (1, H)
    s_enc = jnp.concatenate(
        [jnp.dot(wa_enc, enc_t_ref[b], preferred_element_type=f32)         # (1, T)
         for b in range(B)], axis=0)                                       # (B, T)
    scores = s_enc + s_dec + b_attn_ref[...]                               # (B, T)

    # --- softmax over encoder positions
    m = jnp.max(scores, axis=-1, keepdims=True)
    e = jnp.exp(scores - m)
    wts = e / jnp.sum(e, axis=-1, keepdims=True)                           # (B, T)
    attn_ref[...] = wts

    # --- context = attn_wts @ enc   (per-batch (1,T)@(T,H) MXU dots; B is static/tiny)
    ctx = jnp.concatenate(
        [jnp.dot(wts[b:b + 1, :], enc_ref[b], preferred_element_type=f32)
         for b in range(B)], axis=0)                                       # (B, H)

    # --- single GRU step, PyTorch gate order (r, z, n); gru input = cat(ctx, inp)
    #     (the concat is avoided by splitting W_ih into its [ctx | inp] column halves)
    def gate(g):
        gi = (jnp.dot(ctx, w_ih_a_ref[g], preferred_element_type=f32)
              + jnp.dot(inp, w_ih_i_ref[g], preferred_element_type=f32)
              + b_ih_ref[g])
        gh = jnp.dot(h0, w_hh_ref[g], preferred_element_type=f32) + b_hh_ref[g]
        return gi, gh

    gi_r, gh_r = gate(0)
    gi_z, gh_z = gate(1)
    gi_n, gh_n = gate(2)
    r = jax.nn.sigmoid(gi_r + gh_r)
    z = jax.nn.sigmoid(gi_z + gh_z)
    n = jnp.tanh(gi_n + r * gh_n)                   # b_hn stays inside r*(...) as in torch
    h_new = (1.0 - z) * n + z * h0                  # (B, H)

    # --- out Linear, fc Linear, softmax
    dec_out = jnp.dot(h_new, w_out_ref[...], preferred_element_type=f32) + b_out_ref[...]
    logits = jnp.dot(dec_out, w_fc_ref[...], preferred_element_type=f32) + b_fc_ref[...]
    lm = jnp.max(logits, axis=-1, keepdims=True)
    le = jnp.exp(logits - lm)
    probs_ref[...] = le / jnp.sum(le, axis=-1, keepdims=True)


# ----------------------------------------------------------------------------
# Wrapper: weight re-layout (free, tiny) + single pallas_call
# ----------------------------------------------------------------------------
def conv3d_decoder_forward(dec_h, enc_outputs, inp, params):
    """dec_h: (1, B, H); enc_outputs: (B, T, H); inp: (B, H) -> (probs (B,O), attn (B,1,T))."""
    B, T, H = enc_outputs.shape
    O = params['fc_w'].shape[0]
    assert params['attn_w'].shape[0] == 1, "forward() only type-checks for max_length == 1"

    f32 = jnp.float32
    enc = enc_outputs.astype(f32)
    enc_t = jnp.transpose(enc, (0, 2, 1))                    # (B, H, T)

    # attn.weight (1, 2H): split into decoder-hidden / encoder halves
    wa = params['attn_w'].astype(f32)
    wa_dec = wa[:, :H]                                       # (1, H)
    wa_enc = wa[:, H:]                                       # (1, H)
    b_attn = params['attn_b'].astype(f32).reshape(1, 1)

    # GRU weights: per-gate (r, z, n), transposed for x @ W form, with the
    # input-to-hidden matrix split into [context | inp] column halves.
    w_ih_t = params['gru_w_ih'].astype(f32).T                # (2H, 3H)
    w_hh_t = params['gru_w_hh'].astype(f32).T                # (H, 3H)
    w_ih_a = w_ih_t[:H].reshape(H, 3, H).transpose(1, 0, 2)  # (3, H, H)
    w_ih_i = w_ih_t[H:].reshape(H, 3, H).transpose(1, 0, 2)  # (3, H, H)
    w_hh_g = w_hh_t.reshape(H, 3, H).transpose(1, 0, 2)      # (3, H, H)
    b_ih_g = params['gru_b_ih'].astype(f32).reshape(3, 1, H)
    b_hh_g = params['gru_b_hh'].astype(f32).reshape(3, 1, H)

    w_out_t = params['out_w'].astype(f32).T                  # (H, H)
    b_out = params['out_b'].astype(f32).reshape(1, H)
    w_fc_t = params['fc_w'].astype(f32).T                    # (H, O)
    b_fc = params['fc_b'].astype(f32).reshape(1, O)

    probs, attn = pl.pallas_call(
        _decoder_kernel,
        out_shape=(jax.ShapeDtypeStruct((B, O), f32),
                   jax.ShapeDtypeStruct((B, T), f32)),
        compiler_params=pltpu.CompilerParams(),
    )(dec_h[0].astype(f32), enc, enc_t, inp.astype(f32),
      wa_dec, wa_enc, b_attn,
      w_ih_a, w_ih_i, w_hh_g, b_ih_g, b_hh_g,
      w_out_t, b_out, w_fc_t, b_fc)

    return probs, attn.reshape(B, 1, T)


# ----------------------------------------------------------------------------
# Pure-JAX reference (direct transcription of the PyTorch forward)
# ----------------------------------------------------------------------------
def _reference_forward(dec_h, enc, inp, params):
    with jax.default_matmul_precision('float32'):
        B, T, H = enc.shape
        h0 = dec_h[0]
        wa, ba = params['attn_w'], params['attn_b']
        scores = jnp.stack(
            [jnp.concatenate([h0, enc[:, t]], axis=1) @ wa.T + ba for t in range(T)],
            axis=-1)                                                  # (B, 1, T)
        wts = jax.nn.softmax(scores, axis=-1)
        ctx = jnp.einsum('blt,bth->blh', wts, enc)                    # (B, 1, H)
        x = jnp.concatenate([ctx[:, 0], inp], axis=-1)                # (B, 2H)
        gi = x @ params['gru_w_ih'].T + params['gru_b_ih']
        gh = h0 @ params['gru_w_hh'].T + params['gru_b_hh']
        r = jax.nn.sigmoid(gi[:, :H] + gh[:, :H])
        z = jax.nn.sigmoid(gi[:, H:2 * H] + gh[:, H:2 * H])
        n = jnp.tanh(gi[:, 2 * H:] + r * gh[:, 2 * H:])
        hn = (1.0 - z) * n + z * h0
        dec_out = hn @ params['out_w'].T + params['out_b']
        probs = jax.nn.softmax(dec_out @ params['fc_w'].T + params['fc_b'], axis=1)
        return probs, wts


# ----------------------------------------------------------------------------
# Deterministic parameter init (shapes from the nn.Module definitions)
# ----------------------------------------------------------------------------
def init_params(key, hidden, output_size, max_length=1):
    def u(k, shape, bound):
        return jax.random.uniform(k, shape, jnp.float32, -bound, bound)

    keys = jax.random.split(key, 11)
    p = {}
    ba = 1.0 / math.sqrt(2 * hidden)
    p['attn_w'] = u(keys[0], (max_length, 2 * hidden), ba)   # Linear(2H, max_length)
    p['attn_b'] = u(keys[1], (max_length,), ba)
    bg = 1.0 / math.sqrt(hidden)
    p['gru_w_ih'] = u(keys[2], (3 * hidden, 2 * hidden), bg)  # GRU(2H, H)
    p['gru_w_hh'] = u(keys[3], (3 * hidden, hidden), bg)
    p['gru_b_ih'] = u(keys[4], (3 * hidden,), bg)
    p['gru_b_hh'] = u(keys[5], (3 * hidden,), bg)
    p['out_w'] = u(keys[6], (hidden, hidden), bg)             # AttentionDecoder.out
    p['out_b'] = u(keys[7], (hidden,), bg)
    p['fc_w'] = u(keys[8], (output_size, hidden), bg)         # Conv3DDecoder.fc
    p['fc_b'] = u(keys[9], (output_size,), bg)
    # deconv1/2/3, attn_combine, dropout: declared but unused in forward() -> omitted.
    return p, keys[10]


if __name__ == "__main__":
    B, T, HIDDEN, OUT = 2, 8, 32, 16          # batch, encoder length, hidden, output_size

    key = jax.random.PRNGKey(0)
    params, key = init_params(key, HIDDEN, OUT, max_length=1)
    key, k1, k2, k3 = jax.random.split(key, 4)
    dec_h = jax.random.normal(k1, (1, B, HIDDEN), jnp.float32) * 0.1   # (n_layers*dirs, B, H)
    enc_outputs = jax.random.normal(k2, (B, T, HIDDEN), jnp.float32)
    inp = jax.random.normal(k3, (B, HIDDEN), jnp.float32)

    fwd = jax.jit(lambda dh, eo, ip: conv3d_decoder_forward(dh, eo, ip, params))
    probs, attn_wts = fwd(dec_h, enc_outputs, inp)
    probs, attn_wts = jax.block_until_ready((probs, attn_wts))

    assert probs.shape == (B, OUT)
    assert attn_wts.shape == (B, 1, T)
    assert bool(jnp.all(jnp.abs(jnp.sum(probs, axis=-1) - 1.0) < 1e-4))
    assert bool(jnp.all(jnp.abs(jnp.sum(attn_wts, axis=-1) - 1.0) < 1e-4))

    ref_probs, ref_wts = _reference_forward(dec_h, enc_outputs, inp, params)
    assert bool(jnp.max(jnp.abs(probs - ref_probs)) < 1e-3)
    assert bool(jnp.max(jnp.abs(attn_wts - ref_wts)) < 1e-3)

    print("KERNEL_OK")
</pallas_src>

<mosaic_0001>
module attributes {stable_mosaic.version = 11 : i64} {
  func.func @_decoder_kernel(%arg0: memref<2x32xf32, #tpu.memory_space<vmem>>, %arg1: memref<2x8x32xf32, #tpu.memory_space<vmem>>, %arg2: memref<2x32x8xf32, #tpu.memory_space<vmem>>, %arg3: memref<2x32xf32, #tpu.memory_space<vmem>>, %arg4: memref<1x32xf32, #tpu.memory_space<vmem>>, %arg5: memref<1x32xf32, #tpu.memory_space<vmem>>, %arg6: memref<1x1xf32, #tpu.memory_space<vmem>>, %arg7: memref<3x32x32xf32, #tpu.memory_space<vmem>>, %arg8: memref<3x32x32xf32, #tpu.memory_space<vmem>>, %arg9: memref<3x32x32xf32, #tpu.memory_space<vmem>>, %arg10: memref<3x1x32xf32, #tpu.memory_space<vmem>>, %arg11: memref<3x1x32xf32, #tpu.memory_space<vmem>>, %arg12: memref<32x32xf32, #tpu.memory_space<vmem>>, %arg13: memref<1x32xf32, #tpu.memory_space<vmem>>, %arg14: memref<32x16xf32, #tpu.memory_space<vmem>>, %arg15: memref<1x16xf32, #tpu.memory_space<vmem>>, %arg16: memref<2x16xf32, #tpu.memory_space<vmem>>, %arg17: memref<2x8xf32, #tpu.memory_space<vmem>>) attributes {dimension_semantics = [], scalar_prefetch = 0 : i64, scratch_operands = 0 : i64, tpu.core_type = #tpu.core_type<tc>} {
    %c0 = arith.constant 0 : index
    %c0_0 = arith.constant 0 : index
    %0 = vector.load %arg0[%c0, %c0_0] : memref<2x32xf32, #tpu.memory_space<vmem>>, vector<2x32xf32>
    %c0_1 = arith.constant 0 : index
    %c0_2 = arith.constant 0 : index
    %1 = vector.load %arg3[%c0_1, %c0_2] : memref<2x32xf32, #tpu.memory_space<vmem>>, vector<2x32xf32>
    %c0_3 = arith.constant 0 : index
    %c0_4 = arith.constant 0 : index
    %2 = vector.load %arg4[%c0_3, %c0_4] : memref<1x32xf32, #tpu.memory_space<vmem>>, vector<1x32xf32>
    %3 = vector.broadcast %2 : vector<1x32xf32> to vector<2x32xf32>
    %4 = arith.mulf %0, %3 : vector<2x32xf32>
    %cst = arith.constant dense<0.000000e+00> : vector<2xf32>
    %5 = vector.multi_reduction <add>, %4, %cst [1] : vector<2x32xf32> to vector<2xf32>
    %6 = vector.shape_cast %5 : vector<2xf32> to vector<2x1xf32>
    %c0_5 = arith.constant 0 : index
    %c0_6 = arith.constant 0 : index
    %7 = vector.load %arg5[%c0_5, %c0_6] : memref<1x32xf32, #tpu.memory_space<vmem>>, vector<1x32xf32>
    %c0_7 = arith.constant 0 : index
    %c0_8 = arith.constant 0 : index
    %c0_9 = arith.constant 0 : index
    %8 = vector.load %arg2[%c0_7, %c0_8, %c0_9] : memref<2x32x8xf32, #tpu.memory_space<vmem>>, vector<1x32x8xf32>
    %9 = vector.shape_cast %8 : vector<1x32x8xf32> to vector<32x8xf32>
    %cst_10 = arith.constant dense<0.000000e+00> : vector<1x8xf32>
    %10 = tpu.matmul %7, %9, %cst_10 {dimension_numbers = #tpu.dot_dimension_numbers<[1], [0], [0], [1], [0, 0, 1, 1], [], []>} : vector<1x32xf32>, vector<32x8xf32>, vector<1x8xf32> -> vector<1x8xf32>
    %c1 = arith.constant 1 : index
    %c0_11 = arith.constant 0 : index
    %c0_12 = arith.constant 0 : index
    %11 = vector.load %arg2[%c1, %c0_11, %c0_12] : memref<2x32x8xf32, #tpu.memory_space<vmem>>, vector<1x32x8xf32>
    %12 = vector.shape_cast %11 : vector<1x32x8xf32> to vector<32x8xf32>
    %cst_13 = arith.constant dense<0.000000e+00> : vector<1x8xf32>
    %13 = tpu.matmul %7, %12, %cst_13 {dimension_numbers = #tpu.dot_dimension_numbers<[1], [0], [0], [1], [0, 0, 1, 1], [], []>} : vector<1x32xf32>, vector<32x8xf32>, vector<1x8xf32> -> vector<1x8xf32>
    %14 = tpu.concatenate %10, %13 in 0 : vector<1x8xf32>, vector<1x8xf32> -> vector<2x8xf32>
    %15 = vector.broadcast %6 : vector<2x1xf32> to vector<2x8xf32>
    %16 = arith.addf %14, %15 : vector<2x8xf32>
    %c0_14 = arith.constant 0 : index
    %c0_15 = arith.constant 0 : index
    %17 = vector.load %arg6[%c0_14, %c0_15] : memref<1x1xf32, #tpu.memory_space<vmem>>, vector<1x1xf32>
    %18 = vector.broadcast %17 : vector<1x1xf32> to vector<2x8xf32>
    %19 = arith.addf %16, %18 : vector<2x8xf32>
    %cst_16 = arith.constant dense<0xFF800000> : vector<2xf32>
    %20 = vector.multi_reduction <maximumf>, %19, %cst_16 [1] : vector<2x8xf32> to vector<2xf32>
    %21 = vector.shape_cast %20 : vector<2xf32> to vector<2x1xf32>
    %22 = vector.broadcast %21 : vector<2x1xf32> to vector<2x8xf32>
    %23 = arith.subf %19, %22 : vector<2x8xf32>
    %24 = math.exp %23 : vector<2x8xf32>
    %cst_17 = arith.constant dense<0.000000e+00> : vector<2xf32>
    %25 = vector.multi_reduction <add>, %24, %cst_17 [1] : vector<2x8xf32> to vector<2xf32>
    %26 = vector.shape_cast %25 : vector<2xf32> to vector<2x1xf32>
    %27 = vector.broadcast %26 : vector<2x1xf32> to vector<2x8xf32>
    %28 = arith.divf %24, %27 : vector<2x8xf32>
    %c0_18 = arith.constant 0 : index
    %c0_19 = arith.constant 0 : index
    %29 = vector.load %arg17[%c0_18, %c0_19] : memref<2x8xf32, #tpu.memory_space<vmem>>, vector<2x8xf32>
    tpu.vector_store %arg17[%c0_18, %c0_19], %28 {strides = array<i32>} : memref<2x8xf32, #tpu.memory_space<vmem>>, vector<2x8xf32>,
    %30 = vector.extract_strided_slice %28 {offsets = [0, 0], sizes = [1, 8], strides = [1, 1]} : vector<2x8xf32> to vector<1x8xf32>
    %c0_20 = arith.constant 0 : index
    %c0_21 = arith.constant 0 : index
    %c0_22 = arith.constant 0 : index
    %31 = vector.load %arg1[%c0_20, %c0_21, %c0_22] : memref<2x8x32xf32, #tpu.memory_space<vmem>>, vector<1x8x32xf32>
    %32 = vector.shape_cast %31 : vector<1x8x32xf32> to vector<8x32xf32>
    %cst_23 = arith.constant dense<0.000000e+00> : vector<1x32xf32>
    %33 = tpu.matmul %30, %32, %cst_23 {dimension_numbers = #tpu.dot_dimension_numbers<[1], [0], [0], [1], [0, 0, 1, 1], [], []>} : vector<1x8xf32>, vector<8x32xf32>, vector<1x32xf32> -> vector<1x32xf32>
    %34 = vector.extract_strided_slice %28 {offsets = [1, 0], sizes = [1, 8], strides = [1, 1]} : vector<2x8xf32> to vector<1x8xf32>
    %c1_24 = arith.constant 1 : index
    %c0_25 = arith.constant 0 : index
    %c0_26 = arith.constant 0 : index
    %35 = vector.load %arg1[%c1_24, %c0_25, %c0_26] : memref<2x8x32xf32, #tpu.memory_space<vmem>>, vector<1x8x32xf32>
    %36 = vector.shape_cast %35 : vector<1x8x32xf32> to vector<8x32xf32>
    %cst_27 = arith.constant dense<0.000000e+00> : vector<1x32xf32>
    %37 = tpu.matmul %34, %36, %cst_27 {dimension_numbers = #tpu.dot_dimension_numbers<[1], [0], [0], [1], [0, 0, 1, 1], [], []>} : vector<1x8xf32>, vector<8x32xf32>, vector<1x32xf32> -> vector<1x32xf32>
    %38 = tpu.concatenate %33, %37 in 0 : vector<1x32xf32>, vector<1x32xf32> -> vector<2x32xf32>
    %c0_28 = arith.constant 0 : index
    %c0_29 = arith.constant 0 : index
    %c0_30 = arith.constant 0 : index
    %39 = vector.load %arg7[%c0_28, %c0_29, %c0_30] : memref<3x32x32xf32, #tpu.memory_space<vmem>>, vector<1x32x32xf32>
    %40 = vector.shape_cast %39 : vector<1x32x32xf32> to vector<32x32xf32>
    %cst_31 = arith.constant dense<0.000000e+00> : vector<2x32xf32>
    %41 = tpu.matmul %38, %40, %cst_31 {dimension_numbers = #tpu.dot_dimension_numbers<[1], [0], [0], [1], [0, 0, 1, 1], [], []>} : vector<2x32xf32>, vector<32x32xf32>, vector<2x32xf32> -> vector<2x32xf32>
    %c0_32 = arith.constant 0 : index
    %c0_33 = arith.constant 0 : index
    %c0_34 = arith.constant 0 : index
    %42 = vector.load %arg8[%c0_32, %c0_33, %c0_34] : memref<3x32x32xf32, #tpu.memory_space<vmem>>, vector<1x32x32xf32>
    %43 = vector.shape_cast %42 : vector<1x32x32xf32> to vector<32x32xf32>
    %cst_35 = arith.constant dense<0.000000e+00> : vector<2x32xf32>
    %44 = tpu.matmul %1, %43, %cst_35 {dimension_numbers = #tpu.dot_dimension_numbers<[1], [0], [0], [1], [0, 0, 1, 1], [], []>} : vector<2x32xf32>, vector<32x32xf32>, vector<2x32xf32> -> vector<2x32xf32>
    %45 = arith.addf %41, %44 : vector<2x32xf32>
    %c0_36 = arith.constant 0 : index
    %c0_37 = arith.constant 0 : index
    %c0_38 = arith.constant 0 : index
    %46 = vector.load %arg10[%c0_36, %c0_37, %c0_38] : memref<3x1x32xf32, #tpu.memory_space<vmem>>, vector<1x1x32xf32>
    %47 = vector.shape_cast %46 : vector<1x1x32xf32> to vector<1x32xf32>
    %48 = vector.broadcast %47 : vector<1x32xf32> to vector<2x32xf32>
    %49 = arith.addf %45, %48 : vector<2x32xf32>
    %c0_39 = arith.constant 0 : index
    %c0_40 = arith.constant 0 : index
    %c0_41 = arith.constant 0 : index
    %50 = vector.load %arg9[%c0_39, %c0_40, %c0_41] : memref<3x32x32xf32, #tpu.memory_space<vmem>>, vector<1x32x32xf32>
    %51 = vector.shape_cast %50 : vector<1x32x32xf32> to vector<32x32xf32>
    %cst_42 = arith.constant dense<0.000000e+00> : vector<2x32xf32>
    %52 = tpu.matmul %0, %51, %cst_42 {dimension_numbers = #tpu.dot_dimension_numbers<[1], [0], [0], [1], [0, 0, 1, 1], [], []>} : vector<2x32xf32>, vector<32x32xf32>, vector<2x32xf32> -> vector<2x32xf32>
    %c0_43 = arith.constant 0 : index
    %c0_44 = arith.constant 0 : index
    %c0_45 = arith.constant 0 : index
    %53 = vector.load %arg11[%c0_43, %c0_44, %c0_45] : memref<3x1x32xf32, #tpu.memory_space<vmem>>, vector<1x1x32xf32>
    %54 = vector.shape_cast %53 : vector<1x1x32xf32> to vector<1x32xf32>
    %55 = vector.broadcast %54 : vector<1x32xf32> to vector<2x32xf32>
    %56 = arith.addf %52, %55 : vector<2x32xf32>
    %c1_46 = arith.constant 1 : index
    %c0_47 = arith.constant 0 : index
    %c0_48 = arith.constant 0 : index
    %57 = vector.load %arg7[%c1_46, %c0_47, %c0_48] : memref<3x32x32xf32, #tpu.memory_space<vmem>>, vector<1x32x32xf32>
    %58 = vector.shape_cast %57 : vector<1x32x32xf32> to vector<32x32xf32>
    %cst_49 = arith.constant dense<0.000000e+00> : vector<2x32xf32>
    %59 = tpu.matmul %38, %58, %cst_49 {dimension_numbers = #tpu.dot_dimension_numbers<[1], [0], [0], [1], [0, 0, 1, 1], [], []>} : vector<2x32xf32>, vector<32x32xf32>, vector<2x32xf32> -> vector<2x32xf32>
    %c1_50 = arith.constant 1 : index
    %c0_51 = arith.constant 0 : index
    %c0_52 = arith.constant 0 : index
    %60 = vector.load %arg8[%c1_50, %c0_51, %c0_52] : memref<3x32x32xf32, #tpu.memory_space<vmem>>, vector<1x32x32xf32>
    %61 = vector.shape_cast %60 : vector<1x32x32xf32> to vector<32x32xf32>
    %cst_53 = arith.constant dense<0.000000e+00> : vector<2x32xf32>
    %62 = tpu.matmul %1, %61, %cst_53 {dimension_numbers = #tpu.dot_dimension_numbers<[1], [0], [0], [1], [0, 0, 1, 1], [], []>} : vector<2x32xf32>, vector<32x32xf32>, vector<2x32xf32> -> vector<2x32xf32>
    %63 = arith.addf %59, %62 : vector<2x32xf32>
    %c1_54 = arith.constant 1 : index
    %c0_55 = arith.constant 0 : index
    %c0_56 = arith.constant 0 : index
    %64 = vector.load %arg10[%c1_54, %c0_55, %c0_56] : memref<3x1x32xf32, #tpu.memory_space<vmem>>, vector<1x1x32xf32>
    %65 = vector.shape_cast %64 : vector<1x1x32xf32> to vector<1x32xf32>
    %66 = vector.broadcast %65 : vector<1x32xf32> to vector<2x32xf32>
    %67 = arith.addf %63, %66 : vector<2x32xf32>
    %c1_57 = arith.constant 1 : index
    %c0_58 = arith.constant 0 : index
    %c0_59 = arith.constant 0 : index
    %68 = vector.load %arg9[%c1_57, %c0_58, %c0_59] : memref<3x32x32xf32, #tpu.memory_space<vmem>>, vector<1x32x32xf32>
    %69 = vector.shape_cast %68 : vector<1x32x32xf32> to vector<32x32xf32>
    %cst_60 = arith.constant dense<0.000000e+00> : vector<2x32xf32>
    %70 = tpu.matmul %0, %69, %cst_60 {dimension_numbers = #tpu.dot_dimension_numbers<[1], [0], [0], [1], [0, 0, 1, 1], [], []>} : vector<2x32xf32>, vector<32x32xf32>, vector<2x32xf32> -> vector<2x32xf32>
    %c1_61 = arith.constant 1 : index
    %c0_62 = arith.constant 0 : index
    %c0_63 = arith.constant 0 : index
    %71 = vector.load %arg11[%c1_61, %c0_62, %c0_63] : memref<3x1x32xf32, #tpu.memory_space<vmem>>, vector<1x1x32xf32>
    %72 = vector.shape_cast %71 : vector<1x1x32xf32> to vector<1x32xf32>
    %73 = vector.broadcast %72 : vector<1x32xf32> to vector<2x32xf32>
    %74 = arith.addf %70, %73 : vector<2x32xf32>
    %c2 = arith.constant 2 : index
    %c0_64 = arith.constant 0 : index
    %c0_65 = arith.constant 0 : index
    %75 = vector.load %arg7[%c2, %c0_64, %c0_65] : memref<3x32x32xf32, #tpu.memory_space<vmem>>, vector<1x32x32xf32>
    %76 = vector.shape_cast %75 : vector<1x32x32xf32> to vector<32x32xf32>
    %cst_66 = arith.constant dense<0.000000e+00> : vector<2x32xf32>
    %77 = tpu.matmul %38, %76, %cst_66 {dimension_numbers = #tpu.dot_dimension_numbers<[1], [0], [0], [1], [0, 0, 1, 1], [], []>} : vector<2x32xf32>, vector<32x32xf32>, vector<2x32xf32> -> vector<2x32xf32>
    %c2_67 = arith.constant 2 : index
    %c0_68 = arith.constant 0 : index
    %c0_69 = arith.constant 0 : index
    %78 = vector.load %arg8[%c2_67, %c0_68, %c0_69] : memref<3x32x32xf32, #tpu.memory_space<vmem>>, vector<1x32x32xf32>
    %79 = vector.shape_cast %78 : vector<1x32x32xf32> to vector<32x32xf32>
    %cst_70 = arith.constant dense<0.000000e+00> : vector<2x32xf32>
    %80 = tpu.matmul %1, %79, %cst_70 {dimension_numbers = #tpu.dot_dimension_numbers<[1], [0], [0], [1], [0, 0, 1, 1], [], []>} : vector<2x32xf32>, vector<32x32xf32>, vector<2x32xf32> -> vector<2x32xf32>
    %81 = arith.addf %77, %80 : vector<2x32xf32>
    %c2_71 = arith.constant 2 : index
    %c0_72 = arith.constant 0 : index
    %c0_73 = arith.constant 0 : index
    %82 = vector.load %arg10[%c2_71, %c0_72, %c0_73] : memref<3x1x32xf32, #tpu.memory_space<vmem>>, vector<1x1x32xf32>
    %83 = vector.shape_cast %82 : vector<1x1x32xf32> to vector<1x32xf32>
    %84 = vector.broadcast %83 : vector<1x32xf32> to vector<2x32xf32>
    %85 = arith.addf %81, %84 : vector<2x32xf32>
    %c2_74 = arith.constant 2 : index
    %c0_75 = arith.constant 0 : index
    %c0_76 = arith.constant 0 : index
    %86 = vector.load %arg9[%c2_74, %c0_75, %c0_76] : memref<3x32x32xf32, #tpu.memory_space<vmem>>, vector<1x32x32xf32>
    %87 = vector.shape_cast %86 : vector<1x32x32xf32> to vector<32x32xf32>
    %cst_77 = arith.constant dense<0.000000e+00> : vector<2x32xf32>
    %88 = tpu.matmul %0, %87, %cst_77 {dimension_numbers = #tpu.dot_dimension_numbers<[1], [0], [0], [1], [0, 0, 1, 1], [], []>} : vector<2x32xf32>, vector<32x32xf32>, vector<2x32xf32> -> vector<2x32xf32>
    %c2_78 = arith.constant 2 : index
    %c0_79 = arith.constant 0 : index
    %c0_80 = arith.constant 0 : index
    %89 = vector.load %arg11[%c2_78, %c0_79, %c0_80] : memref<3x1x32xf32, #tpu.memory_space<vmem>>, vector<1x1x32xf32>
    %90 = vector.shape_cast %89 : vector<1x1x32xf32> to vector<1x32xf32>
    %91 = vector.broadcast %90 : vector<1x32xf32> to vector<2x32xf32>
    %92 = arith.addf %88, %91 : vector<2x32xf32>
    %93 = arith.addf %49, %56 : vector<2x32xf32>
    %94 = arith.negf %93 : vector<2x32xf32>
    %95 = math.exp %94 : vector<2x32xf32>
    %cst_81 = arith.constant 1.000000e+00 : f32
    %96 = vector.broadcast %cst_81 : f32 to vector<2x32xf32>
    %97 = arith.addf %96, %95 : vector<2x32xf32>
    %98 = arith.divf %96, %97 : vector<2x32xf32>
    %99 = arith.addf %67, %74 : vector<2x32xf32>
    %100 = arith.negf %99 : vector<2x32xf32>
    %101 = math.exp %100 : vector<2x32xf32>
    %cst_82 = arith.constant 1.000000e+00 : f32
    %102 = vector.broadcast %cst_82 : f32 to vector<2x32xf32>
    %103 = arith.addf %102, %101 : vector<2x32xf32>
    %104 = arith.divf %102, %103 : vector<2x32xf32>
    %105 = arith.mulf %98, %92 : vector<2x32xf32>
    %106 = arith.addf %85, %105 : vector<2x32xf32>
    %107 = math.tanh %106 : vector<2x32xf32>
    %cst_83 = arith.constant 1.000000e+00 : f32
    %108 = vector.broadcast %cst_83 : f32 to vector<2x32xf32>
    %109 = arith.subf %108, %104 : vector<2x32xf32>
    %110 = arith.mulf %109, %107 : vector<2x32xf32>
    %111 = arith.mulf %104, %0 : vector<2x32xf32>
    %112 = arith.addf %110, %111 : vector<2x32xf32>
    %c0_84 = arith.constant 0 : index
    %c0_85 = arith.constant 0 : index
    %113 = vector.load %arg12[%c0_84, %c0_85] : memref<32x32xf32, #tpu.memory_space<vmem>>, vector<32x32xf32>
    %cst_86 = arith.constant dense<0.000000e+00> : vector<2x32xf32>
    %114 = tpu.matmul %112, %113, %cst_86 {dimension_numbers = #tpu.dot_dimension_numbers<[1], [0], [0], [1], [0, 0, 1, 1], [], []>} : vector<2x32xf32>, vector<32x32xf32>, vector<2x32xf32> -> vector<2x32xf32>
    %c0_87 = arith.constant 0 : index
    %c0_88 = arith.constant 0 : index
    %115 = vector.load %arg13[%c0_87, %c0_88] : memref<1x32xf32, #tpu.memory_space<vmem>>, vector<1x32xf32>
    %116 = vector.broadcast %115 : vector<1x32xf32> to vector<2x32xf32>
    %117 = arith.addf %114, %116 : vector<2x32xf32>
    %c0_89 = arith.constant 0 : index
    %c0_90 = arith.constant 0 : index
    %118 = vector.load %arg14[%c0_89, %c0_90] : memref<32x16xf32, #tpu.memory_space<vmem>>, vector<32x16xf32>
    %cst_91 = arith.constant dense<0.000000e+00> : vector<2x16xf32>
    %119 = tpu.matmul %117, %118, %cst_91 {dimension_numbers = #tpu.dot_dimension_numbers<[1], [0], [0], [1], [0, 0, 1, 1], [], []>} : vector<2x32xf32>, vector<32x16xf32>, vector<2x16xf32> -> vector<2x16xf32>
    %c0_92 = arith.constant 0 : index
    %c0_93 = arith.constant 0 : index
    %120 = vector.load %arg15[%c0_92, %c0_93] : memref<1x16xf32, #tpu.memory_space<vmem>>, vector<1x16xf32>
    %121 = vector.broadcast %120 : vector<1x16xf32> to vector<2x16xf32>
    %122 = arith.addf %119, %121 : vector<2x16xf32>
    %cst_94 = arith.constant dense<0xFF800000> : vector<2xf32>
    %123 = vector.multi_reduction <maximumf>, %122, %cst_94 [1] : vector<2x16xf32> to vector<2xf32>
    %124 = vector.shape_cast %123 : vector<2xf32> to vector<2x1xf32>
    %125 = vector.broadcast %124 : vector<2x1xf32> to vector<2x16xf32>
    %126 = arith.subf %122, %125 : vector<2x16xf32>
    %127 = math.exp %126 : vector<2x16xf32>
    %cst_95 = arith.constant dense<0.000000e+00> : vector<2xf32>
    %128 = vector.multi_reduction <add>, %127, %cst_95 [1] : vector<2x16xf32> to vector<2xf32>
    %129 = vector.shape_cast %128 : vector<2xf32> to vector<2x1xf32>
    %130 = vector.broadcast %129 : vector<2x1xf32> to vector<2x16xf32>
    %131 = arith.divf %127, %130 : vector<2x16xf32>
    %c0_96 = arith.constant 0 : index
    %c0_97 = arith.constant 0 : index
    %132 = vector.load %arg16[%c0_96, %c0_97] : memref<2x16xf32, #tpu.memory_space<vmem>>, vector<2x16xf32>
    tpu.vector_store %arg16[%c0_96, %c0_97], %131 {strides = array<i32>} : memref<2x16xf32, #tpu.memory_space<vmem>>, vector<2x16xf32>,
    return
  }
}

</mosaic_0001>

<llo_original>
// kernel: _lambda_.1
$region0: #{_lambda_.1}
  #allocation0 [shape = 'u32[]', space=smem, size = 0x4, offset = 0x4, fixed_abs, tag = 'smem constant byte address 0x4 - core index']
  #allocation1 [shape = 'u32[72,128]{1,0:T(1,128)}', space=vmem, size = 0x9000, scoped, tag = 'internal scratch']
  #allocation2 [shape = 'f32[1,1]{1,0:T(1,128)S(1)}', space=vmem, size = 0x200, scoped, tag = 'scoped memory for _lambda_.1']
  %s0 = inlined_call_operand.hbm [shape: f32[2,32], index: 0, kind: input, shape index: {}]
  %s1 = inlined_call_operand.vmem [shape: f32[2,8,32], index: 1, kind: input, shape index: {}]
  %s2 = inlined_call_operand.vmem [shape: f32[2,32,8], index: 2, kind: input, shape index: {}]
  %s3 = inlined_call_operand.hbm [shape: f32[2,32], index: 3, kind: input, shape index: {}]
  %s4 = inlined_call_operand.vmem [shape: f32[1,32], index: 4, kind: input, shape index: {}]
  %s5 = inlined_call_operand.vmem [shape: f32[1,32], index: 5, kind: input, shape index: {}]
  %s6 = inlined_call_operand.<no memory space> [shape: f32[1,1], index: 6, kind: input, shape index: {}]
  %s7 = inlined_call_operand.hbm [shape: f32[3,32,32], index: 7, kind: input, shape index: {}]
  %s8 = inlined_call_operand.hbm [shape: f32[3,32,32], index: 8, kind: input, shape index: {}]
  %s9 = inlined_call_operand.hbm [shape: f32[3,32,32], index: 9, kind: input, shape index: {}]
  %s10 = inlined_call_operand.vmem [shape: f32[3,1,32], index: 10, kind: input, shape index: {}]
  %s11 = inlined_call_operand.vmem [shape: f32[3,1,32], index: 11, kind: input, shape index: {}]
  %s12 = inlined_call_operand.vmem [shape: f32[32,32], index: 12, kind: input, shape index: {}]
  %s13 = inlined_call_operand.hbm [shape: f32[1,32], index: 13, kind: input, shape index: {}]
  %s14 = inlined_call_operand.vmem [shape: f32[32,16], index: 14, kind: input, shape index: {}]
  %s15 = inlined_call_operand.hbm [shape: f32[1,16], index: 15, kind: input, shape index: {}]
  %s16 = inlined_call_operand.hbm [shape: f32[2,16], index: 16, kind: output, shape index: {0}]
  %s17 = inlined_call_operand.hbm [shape: f32[2,8], index: 17, kind: output, shape index: {1}]
  %18 = xla_tuple %s16, %s17
  %s19 = sld [smem:[#allocation0]]
  $region110: #{_lambda_.1} parent=0
    _
  %s21 = ssub.s32 1, %s19
  %s22 = scalar_select 0, %s21, %s19
  %v23 = vstv %s6
  %24 = vst [vmem:[#allocation2] sm:$0x1] %v23
  $region1: #{_lambda_.1} parent=0
    #allocation3 [shape = 'u8[1024]{0}', space=vmem, size = 0x400, scoped, tag = 'input window, operand 0, single buffered']
    #allocation4 [shape = 's32[1]{0}', space=sflag, size = 0x4, scoped, tag = 'scoped memory for _lambda_.1']
    #allocation5 [shape = 's32[1]{0}', space=sflag, size = 0x4, scoped, tag = 'scoped memory for _lambda_.1']
    #allocation6 [shape = 'u8[1024]{0}', space=vmem, size = 0x400, scoped, tag = 'input window, operand 3, single buffered']
    #allocation7 [shape = 's32[1]{0}', space=sflag, size = 0x4, scoped, tag = 'scoped memory for _lambda_.1']
    #allocation8 [shape = 'u8[49152]{0}', space=vmem, size = 0xc000, scoped, tag = 'input window, operand 7, single buffered']
    #allocation9 [shape = 'u8[49152]{0}', space=vmem, size = 0xc000, scoped, tag = 'input window, operand 8, single buffered']
    #allocation10 [shape = 's32[1]{0}', space=sflag, size = 0x4, scoped, tag = 'scoped memory for _lambda_.1']
    #allocation11 [shape = 'u8[49152]{0}', space=vmem, size = 0xc000, scoped, tag = 'input window, operand 9, single buffered']
    #allocation12 [shape = 'u8[512]{0}', space=vmem, size = 0x400, scoped, tag = 'input window, operand 13, single buffered']
    #allocation13 [shape = 's32[1]{0}', space=sflag, size = 0x4, scoped, tag = 'scoped memory for _lambda_.1']
    #allocation14 [shape = 'u8[512]{0}', space=vmem, size = 0x400, scoped, tag = 'input window, operand 15, single buffered']
    #allocation15 [shape = 'u8[1024]{0}', space=vmem, size = 0x400, scoped, tag = 'output window, operand 0, single buffered']
    #allocation16 [shape = 'u8[1024]{0}', space=vmem, size = 0x400, scoped, tag = 'output window, operand 1, single buffered']
    #allocation17 [shape = 's32[1]{0}', space=sflag, size = 0x4, scoped, tag = 'scoped memory for _lambda_.1']
    %25 = vsyncpa [#allocation4], 0
    %26 = vsyncpa [#allocation7], 0
    %27 = vsyncpa [#allocation10], 0
    %28 = vsyncpa [#allocation13], 0
    %29 = vsyncpa [#allocation5], 0
    %30 = vsyncpa [#allocation17], 0
    // Predicated region
    $region2: #{_lambda_.1} parent=1 // pred_check
      _
    $region3: #{_lambda_.1} parent=1 // pred_check_branch
      %32 = sbr.rel (0) target = $region5
    $region4: #{_lambda_.1} parent=1 // pred_region
      %34 = vsyncadd [#allocation4], 0
      %s36 = sshll.u32 %s0, 4
      %s37 = int_to_ptr.hbm [resolvable:$true] %s36
      %s38 = sshll.u32 [#allocation3], 4
      %s39 = int_to_ptr.vmem [resolvable:$true] %s38
      %41 = dma.hbm_to_vmem [thread:$0]  %s37, 32, %s39, [#allocation4]
    $region5: #{_lambda_.1} parent=1 // pred_fallthru
      _
    // Predicated region
    $region6: #{_lambda_.1} parent=1 // pred_check
      _
    $region7: #{_lambda_.1} parent=1 // pred_check_branch
      %43 = sbr.rel (0) target = $region9
    $region8: #{_lambda_.1} parent=1 // pred_region
      _
    $region9: #{_lambda_.1} parent=1 // pred_fallthru
      _
    // Predicated region
    $region10: #{_lambda_.1} parent=1 // pred_check
      _
    $region11: #{_lambda_.1} parent=1 // pred_check_branch
      %45 = sbr.rel (0) target = $region13
    $region12: #{_lambda_.1} parent=1 // pred_region
      _
    $region13: #{_lambda_.1} parent=1 // pred_fallthru
      _
    // Predicated region
    $region14: #{_lambda_.1} parent=1 // pred_check
      _
    $region15: #{_lambda_.1} parent=1 // pred_check_branch
      %47 = sbr.rel (0) target = $region17
    $region16: #{_lambda_.1} parent=1 // pred_region
      %49 = vsyncadd [#allocation7], 0
      %s51 = sshll.u32 %s3, 4
      %s52 = int_to_ptr.hbm [resolvable:$true] %s51
      %s53 = sshll.u32 [#allocation6], 4
      %s54 = int_to_ptr.vmem [resolvable:$true] %s53
      %56 = dma.hbm_to_vmem [thread:$0]  %s52, 32, %s54, [#allocation7]
    $region17: #{_lambda_.1} parent=1 // pred_fallthru
      _
    // Predicated region
    $region18: #{_lambda_.1} parent=1 // pred_check
      _
    $region19: #{_lambda_.1} parent=1 // pred_check_branch
      %58 = sbr.rel (0) target = $region21
    $region20: #{_lambda_.1} parent=1 // pred_region
      _
    $region21: #{_lambda_.1} parent=1 // pred_fallthru
      _
    // Predicated region
    $region22: #{_lambda_.1} parent=1 // pred_check
      _
    $region23: #{_lambda_.1} parent=1 // pred_check_branch
      %60 = sbr.rel (0) target = $region25
    $region24: #{_lambda_.1} parent=1 // pred_region
      _
    $region25: #{_lambda_.1} parent=1 // pred_fallthru
      _
    // Predicated region
    $region26: #{_lambda_.1} parent=1 // pred_check
      _
    $region27: #{_lambda_.1} parent=1 // pred_check_branch
      %62 = sbr.rel (0) target = $region29
    $region28: #{_lambda_.1} parent=1 // pred_region
      _
    $region29: #{_lambda_.1} parent=1 // pred_fallthru
      _
    // Predicated region
    $region30: #{_lambda_.1} parent=1 // pred_check
      _
    $region31: #{_lambda_.1} parent=1 // pred_check_branch
      %64 = sbr.rel (0) target = $region33
    $region32: #{_lambda_.1} parent=1 // pred_region
      %66 = vsyncadd [#allocation7], 0
      %s67 = sshll.u32 %s7, 4
      %s68 = int_to_ptr.hbm [resolvable:$true] %s67
      %s69 = sshll.u32 [#allocation8], 4
      %s70 = int_to_ptr.vmem [resolvable:$true] %s69
      %75 = dma.hbm_to_vmem [thread:$0]  %s68, 1536, %s70, [#allocation7], 128, 128, 8
    $region33: #{_lambda_.1} parent=1 // pred_fallthru
      _
    // Predicated region
    $region34: #{_lambda_.1} parent=1 // pred_check
      _
    $region35: #{_lambda_.1} parent=1 // pred_check_branch
      %77 = sbr.rel (0) target = $region37
    $region36: #{_lambda_.1} parent=1 // pred_region
      %79 = vsyncadd [#allocation10], 0
      %s80 = sshll.u32 %s8, 4
      %s81 = int_to_ptr.hbm [resolvable:$true] %s80
      %s82 = sshll.u32 [#allocation9], 4
      %s83 = int_to_ptr.vmem [resolvable:$true] %s82
      %88 = dma.hbm_to_vmem [thread:$0]  %s81, 1536, %s83, [#allocation10], 128, 128, 8
    $region37: #{_lambda_.1} parent=1 // pred_fallthru
      _
    // Predicated region
    $region38: #{_lambda_.1} parent=1 // pred_check
      _
    $region39: #{_lambda_.1} parent=1 // pred_check_branch
      %90 = sbr.rel (0) target = $region41
    $region40: #{_lambda_.1} parent=1 // pred_region
      %92 = vsyncadd [#allocation10], 0
      %s93 = sshll.u32 %s9, 4
      %s94 = int_to_ptr.hbm [resolvable:$true] %s93
      %s95 = sshll.u32 [#allocation11], 4
      %s96 = int_to_ptr.vmem [resolvable:$true] %s95
      %101 = dma.hbm_to_vmem [thread:$0]  %s94, 1536, %s96, [#allocation10], 128, 128, 8
    $region41: #{_lambda_.1} parent=1 // pred_fallthru
      _
    // Predicated region
    $region42: #{_lambda_.1} parent=1 // pred_check
      _
    $region43: #{_lambda_.1} parent=1 // pred_check_branch
      %103 = sbr.rel (0) target = $region45
    $region44: #{_lambda_.1} parent=1 // pred_region
      _
    $region45: #{_lambda_.1} parent=1 // pred_fallthru
      _
    // Predicated region
    $region46: #{_lambda_.1} parent=1 // pred_check
      _
    $region47: #{_lambda_.1} parent=1 // pred_check_branch
      %105 = sbr.rel (0) target = $region49
    $region48: #{_lambda_.1} parent=1 // pred_region
      _
    $region49: #{_lambda_.1} parent=1 // pred_fallthru
      _
    // Predicated region
    $region50: #{_lambda_.1} parent=1 // pred_check
      _
    $region51: #{_lambda_.1} parent=1 // pred_check_branch
      %107 = sbr.rel (0) target = $region53
    $region52: #{_lambda_.1} parent=1 // pred_region
      _
    $region53: #{_lambda_.1} parent=1 // pred_fallthru
      _
    // Predicated region
    $region54: #{_lambda_.1} parent=1 // pred_check
      _
    $region55: #{_lambda_.1} parent=1 // pred_check_branch
      %109 = sbr.rel (0) target = $region57
    $region56: #{_lambda_.1} parent=1 // pred_region
      %111 = vsyncadd [#allocation13], 0
      %s113 = sshll.u32 %s13, 4
      %s114 = int_to_ptr.hbm [resolvable:$true] %s113
      %s115 = sshll.u32 [#allocation12], 4
      %s116 = int_to_ptr.vmem [resolvable:$true] %s115
      %118 = dma.hbm_to_vmem [thread:$0]  %s114, 16, %s116, [#allocation13]
    $region57: #{_lambda_.1} parent=1 // pred_fallthru
      _
    // Predicated region
    $region58: #{_lambda_.1} parent=1 // pred_check
      _
    $region59: #{_lambda_.1} parent=1 // pred_check_branch
      %120 = sbr.rel (0) target = $region61
    $region60: #{_lambda_.1} parent=1 // pred_region
      _
    $region61: #{_lambda_.1} parent=1 // pred_fallthru
      _
    // Predicated region
    $region62: #{_lambda_.1} parent=1 // pred_check
      _
    $region63: #{_lambda_.1} parent=1 // pred_check_branch
      %122 = sbr.rel (0) target = $region65
    $region64: #{_lambda_.1} parent=1 // pred_region
      %124 = vsyncadd [#allocation13], 0
      %s126 = sshll.u32 %s15, 4
      %s127 = int_to_ptr.hbm [resolvable:$true] %s126
      %s128 = sshll.u32 [#allocation14], 4
      %s129 = int_to_ptr.vmem [resolvable:$true] %s128
      %131 = dma.hbm_to_vmem [thread:$0]  %s127, 16, %s129, [#allocation13]
    $region65: #{_lambda_.1} parent=1 // pred_fallthru
      _
    // Predicated region
    $region66: #{_lambda_.1} parent=1 // pred_check
      _
    $region67: #{_lambda_.1} parent=1 // pred_check_branch
      %133 = sbr.rel (0) target = $region69
    $region68: #{_lambda_.1} parent=1 // pred_region
      %135 = dma.done [#allocation4], 32
    $region69: #{_lambda_.1} parent=1 // pred_fallthru
      _
    // Predicated region
    $region70: #{_lambda_.1} parent=1 // pred_check
      _
    $region71: #{_lambda_.1} parent=1 // pred_check_branch
      %137 = sbr.rel (0) target = $region73
    $region72: #{_lambda_.1} parent=1 // pred_region
      %139 = dma.done [#allocation7], 32
    $region73: #{_lambda_.1} parent=1 // pred_fallthru
      _
    // Predicated region
    $region74: #{_lambda_.1} parent=1 // pred_check
      _
    $region75: #{_lambda_.1} parent=1 // pred_check_branch
      %141 = sbr.rel (0) target = $region77
    $region76: #{_lambda_.1} parent=1 // pred_region
      %143 = dma.done [#allocation7], 1536
    $region77: #{_lambda_.1} parent=1 // pred_fallthru
      _
    // Predicated region
    $region78: #{_lambda_.1} parent=1 // pred_check
      _
    $region79: #{_lambda_.1} parent=1 // pred_check_branch
      %145 = sbr.rel (0) target = $region81
    $region80: #{_lambda_.1} parent=1 // pred_region
      %147 = dma.done [#allocation10], 1536
    $region81: #{_lambda_.1} parent=1 // pred_fallthru
      _
    // Predicated region
    $region82: #{_lambda_.1} parent=1 // pred_check
      _
    $region83: #{_lambda_.1} parent=1 // pred_check_branch
      %149 = sbr.rel (0) target = $region85
    $region84: #{_lambda_.1} parent=1 // pred_region
      %151 = dma.done [#allocation10], 1536
    $region85: #{_lambda_.1} parent=1 // pred_fallthru
      _
    // Predicated region
    $region86: #{_lambda_.1} parent=1 // pred_check
      _
    $region87: #{_lambda_.1} parent=1 // pred_check_branch
      %153 = sbr.rel (0) target = $region89
    $region88: #{_lambda_.1} parent=1 // pred_region
      %155 = dma.done [#allocation13], 16
    $region89: #{_lambda_.1} parent=1 // pred_fallthru
      _
    // Predicated region
    $region90: #{_lambda_.1} parent=1 // pred_check
      _
    $region91: #{_lambda_.1} parent=1 // pred_check_branch
      %157 = sbr.rel (0) target = $region93
    $region92: #{_lambda_.1} parent=1 // pred_region
      %159 = dma.done [#allocation13], 16
    $region93: #{_lambda_.1} parent=1 // pred_fallthru
      _
    %v160 = vld [vmem:[#allocation3] sm:$0x3]
    %v161 = vld [vmem:[#allocation6] sm:$0x3]
    %v162 = vld [vmem:[%s4] sm:$0x1]
    %v164 = vperm.slane %v162, 0
    %v166 = vmul.f32 %v160, %v164
    %vm167 = vcmask 254976
    %v168 = vsel %vm167, %v166, 0.0
    %169 = vadd.xlane.f32.xlu0 %v168
    %v170 = vpop.xlane.xlu0 %169
    %v171 = vld [vmem:[%s5] sm:$0x1]
    %v172 = vld [vmem:[%s2] sm:$0xff]
    %v173 = vld [vmem:[%s2 + $0x8] sm:$0xff]
    %v174 = vld [vmem:[%s2 + $0x10] sm:$0xff]
    %v175 = vld [vmem:[%s2 + $0x18] sm:$0xff]
    %vm176 = vcmask 261120
    %v178 = vsel %vm176, %v171, 0
    %180 = vmatpush.msra.mxu0 0.0
    %181 = vmatpush.msra.mxu0 0.0
    %182 = vmatpush.msra.mxu0 0.0
    %183 = vmatpush.msra.mxu0 0.0
    %184 = vmatpush.msra.mxu0 0.0
    %185 = vmatpush.msra.mxu0 0.0
    %186 = vmatpush.msra.mxu0 0.0
    %187 = vmatpush.msra.mxu0 0.0
    %188 = vmatpush.msra.mxu0 0.0
    %189 = vmatpush.msra.mxu0 0.0
    %190 = vmatpush.msra.mxu0 0.0
    %191 = vmatpush.msra.mxu0 0.0
    %192 = vmatpush.msra.mxu0 %v175
    %193 = vmatpush.msra.mxu0 %v174
    %194 = vmatpush.msra.mxu0 %v173
    %195 = vmatpush.msra.mxu0 %v172
    %196 = vmatmul.f32.gmra.mxu0 %v178
    %v197 = vpop.f32.mrf.mxu0
    %v198 = vadd.f32 0.0, %v197
    %199 = vdwg.mxu0
    %s200 = scalar_lea.vmem %s2, 32
    %v201 = vld [vmem:[%s200] sm:$0xff]
    %v202 = vld [vmem:[%s200 + $0x8] sm:$0xff]
    %v203 = vld [vmem:[%s200 + $0x10] sm:$0xff]
    %v204 = vld [vmem:[%s200 + $0x18] sm:$0xff]
    %205 = vmatpush.msra.mxu0 0.0
    %206 = vmatpush.msra.mxu0 0.0
    %207 = vmatpush.msra.mxu0 0.0
    %208 = vmatpush.msra.mxu0 0.0
    %209 = vmatpush.msra.mxu0 0.0
    %210 = vmatpush.msra.mxu0 0.0
    %211 = vmatpush.msra.mxu0 0.0
    %212 = vmatpush.msra.mxu0 0.0
    %213 = vmatpush.msra.mxu0 0.0
    %214 = vmatpush.msra.mxu0 0.0
    %215 = vmatpush.msra.mxu0 0.0
    %216 = vmatpush.msra.mxu0 0.0
    %217 = vmatpush.msra.mxu0 %v204
    %218 = vmatpush.msra.mxu0 %v203
    %219 = vmatpush.msra.mxu0 %v202
    %220 = vmatpush.msra.mxu0 %v201
    %221 = vmatmul.f32.gmra.mxu0 %v178
    %v222 = vpop.f32.mrf.mxu0
    %v223 = vadd.f32 0.0, %v222
    %224 = vdwg.mxu0
    %v226 = vrot.slane %v223, 7
    %vm228 = vcmask 1040384
    %v229 = vsel %vm228, %v198, %v226
    %v230 = vadd.f32 %v229, %v170
    %v231 = vld [vmem:[#allocation2] sm:$0x1]
    %v233 = vperm.slane %v231, 0
    %234 = vset.pattern.permute.xlu0 0
    %235 = vperm.xlu0 %234, %v233
    %v236 = vpop.permute.xlu0 %235
    %v238 = vadd.f32 %v230, %v236
    %vm239 = vcmask 58368
    %v240 = vsel %vm239, %v238, -inf
    %241 = vmax.xlane.f32.xlu0 %v240
    %v242 = vpop.xlane.xlu0 %241
    %v243 = vsub.f32 %v238, %v242
    %v244 = vmul.f32 %v243, 1.442695
    %v245 = vpow.pop %v244
    %v246 = vsel %vm239, %v245, 0.0
    %247 = vadd.xlane.f32.xlu0 %v246
    %v248 = vpop.xlane.xlu0 %247
    %v249 = vrcp.pop %v248
    %v250 = vmul.f32 %v248, %v249
    %v251 = vsub.f32 1.0, %v250
    %v252 = vmul.f32 %v249, %v251
    %v253 = vadd.f32 %v249, %v252
    %vm254 = vweird.f32 %v248
    %vm255 = vweird.f32 %v249
    %vm256 = vmor %vm254, %vm255
    %v257 = vsel %vm256, %v249, %v253
    %v258 = vand.u32 2147483647, %v248
    %vm259 = vcmp.eq.f32.partialorder %v258, 8.507059e+37
    %v260 = vand.u32 %v248, 2147483648
    %v261 = vor.u32 1.1754944e-38, %v260
    %v262 = vsel %vm259, %v261, %v257
    %v263 = vmul.f32 %v245, %v262
    %264 = vst.msk [vmem:[#allocation16] sm:$0x3] %vm239, %v263
    %v265 = vld [vmem:[%s1] sm:$0xff]
    %vm266 = vcmask 64512
    %v268 = vsel %vm266, %v263, 0
    %270 = vmatpush.msra.mxu0 0.0
    %271 = vmatpush.msra.mxu0 0.0
    %272 = vmatpush.msra.mxu0 0.0
    %273 = vmatpush.msra.mxu0 0.0
    %274 = vmatpush.msra.mxu0 0.0
    %275 = vmatpush.msra.mxu0 0.0
    %276 = vmatpush.msra.mxu0 0.0
    %277 = vmatpush.msra.mxu0 0.0
    %278 = vmatpush.msra.mxu0 0.0
    %279 = vmatpush.msra.mxu0 0.0
    %280 = vmatpush.msra.mxu0 0.0
    %281 = vmatpush.msra.mxu0 0.0
    %282 = vmatpush.msra.mxu0 0.0
    %283 = vmatpush.msra.mxu0 0.0
    %284 = vmatpush.msra.mxu0 0.0
    %285 = vmatpush.msra.mxu0 %v265
    %286 = vmatmul.f32.gmra.mxu0 %v268
    %v287 = vpop.f32.mrf.mxu0
    %v288 = vadd.f32 0.0, %v287
    %289 = vdwg.mxu0
    %s290 = scalar_lea.vmem %s1, 8
    %v291 = vld [vmem:[%s290] sm:$0xff]
    %v292 = vrot.slane %v263, 1
    %v293 = vsel %vm266, %v292, 0
    %295 = vmatpush.msra.mxu0 0.0
    %296 = vmatpush.msra.mxu0 0.0
    %297 = vmatpush.msra.mxu0 0.0
    %298 = vmatpush.msra.mxu0 0.0
    %299 = vmatpush.msra.mxu0 0.0
    %300 = vmatpush.msra.mxu0 0.0
    %301 = vmatpush.msra.mxu0 0.0
    %302 = vmatpush.msra.mxu0 0.0
    %303 = vmatpush.msra.mxu0 0.0
    %304 = vmatpush.msra.mxu0 0.0
    %305 = vmatpush.msra.mxu0 0.0
    %306 = vmatpush.msra.mxu0 0.0
    %307 = vmatpush.msra.mxu0 0.0
    %308 = vmatpush.msra.mxu0 0.0
    %309 = vmatpush.msra.mxu0 0.0
    %310 = vmatpush.msra.mxu0 %v291
    %311 = vmatmul.f32.gmra.mxu0 %v293
    %v312 = vpop.f32.mrf.mxu0
    %v313 = vadd.f32 0.0, %v312
    %314 = vdwg.mxu0
    %v316 = vrot.slane %v313, 7
    %v318 = vsel %vm228, %v288, %v316
    %v319 = vld [vmem:[#allocation8] sm:$0xff]
    %v320 = vld [vmem:[#allocation8 + $0x8] sm:$0xff]
    %v321 = vld [vmem:[#allocation8 + $0x10] sm:$0xff]
    %v322 = vld [vmem:[#allocation8 + $0x18] sm:$0xff]
    %v323 = vld [vmem:[#allocation9] sm:$0xff]
    %v324 = vld [vmem:[#allocation9 + $0x8] sm:$0xff]
    %v325 = vld [vmem:[#allocation9 + $0x10] sm:$0xff]
    %v326 = vld [vmem:[#allocation9 + $0x18] sm:$0xff]
    %v328 = vsel %vm176, %v161, 0
    %330 = vmatpush.msra.mxu0 0.0
    %331 = vmatpush.msra.mxu0 0.0
    %332 = vmatpush.msra.mxu0 0.0
    %333 = vmatpush.msra.mxu0 0.0
    %334 = vmatpush.msra.mxu0 0.0
    %335 = vmatpush.msra.mxu0 0.0
    %336 = vmatpush.msra.mxu0 0.0
    %337 = vmatpush.msra.mxu0 0.0
    %338 = vmatpush.msra.mxu0 0.0
    %339 = vmatpush.msra.mxu0 0.0
    %340 = vmatpush.msra.mxu0 0.0
    %341 = vmatpush.msra.mxu0 0.0
    %342 = vmatpush.msra.mxu0 %v326
    %343 = vmatpush.msra.mxu0 %v325
    %344 = vmatpush.msra.mxu0 %v324
    %345 = vmatpush.msra.mxu0 %v323
    %346 = vmatmul.f32.gmra.mxu0 %v328
    %v347 = vpop.f32.mrf.mxu0
    %v348 = vadd.f32 0.0, %v347
    %349 = vdwg.mxu0
    %v351 = vsel %vm176, %v318, 0
    %353 = vmatpush.msra.mxu0 0.0
    %354 = vmatpush.msra.mxu0 0.0
    %355 = vmatpush.msra.mxu0 0.0
    %356 = vmatpush.msra.mxu0 0.0
    %357 = vmatpush.msra.mxu0 0.0
    %358 = vmatpush.msra.mxu0 0.0
    %359 = vmatpush.msra.mxu0 0.0
    %360 = vmatpush.msra.mxu0 0.0
    %361 = vmatpush.msra.mxu0 0.0
    %362 = vmatpush.msra.mxu0 0.0
    %363 = vmatpush.msra.mxu0 0.0
    %364 = vmatpush.msra.mxu0 0.0
    %365 = vmatpush.msra.mxu0 %v322
    %366 = vmatpush.msra.mxu0 %v321
    %367 = vmatpush.msra.mxu0 %v320
    %368 = vmatpush.msra.mxu0 %v319
    %369 = vmatmul.f32.gmra.mxu0 %v351
    %v370 = vpop.f32.mrf.mxu0
    %v371 = vadd.f32 %v348, %v370
    %372 = vdwg.mxu0
    %v373 = vld [vmem:[%s10] sm:$0x1]
    %v375 = vperm.slane %v373, 0
    %v377 = vadd.f32 %v371, %v375
    %v378 = vld [vmem:[#allocation11] sm:$0xff]
    %v379 = vld [vmem:[#allocation11 + $0x8] sm:$0xff]
    %v380 = vld [vmem:[#allocation11 + $0x10] sm:$0xff]
    %v381 = vld [vmem:[#allocation11 + $0x18] sm:$0xff]
    %v382 = vld [vmem:[%s11] sm:$0x1]
    %v384 = vperm.slane %v382, 0
    %v387 = vsel %vm176, %v160, 0
    %389 = vmatpush.msra.mxu0 0.0
    %390 = vmatpush.msra.mxu0 0.0
    %391 = vmatpush.msra.mxu0 0.0
    %392 = vmatpush.msra.mxu0 0.0
    %393 = vmatpush.msra.mxu0 0.0
    %394 = vmatpush.msra.mxu0 0.0
    %395 = vmatpush.msra.mxu0 0.0
    %396 = vmatpush.msra.mxu0 0.0
    %397 = vmatpush.msra.mxu0 0.0
    %398 = vmatpush.msra.mxu0 0.0
    %399 = vmatpush.msra.mxu0 0.0
    %400 = vmatpush.msra.mxu0 0.0
    %401 = vmatpush.msra.mxu0 %v381
    %402 = vmatpush.msra.mxu0 %v380
    %403 = vmatpush.msra.mxu0 %v379
    %404 = vmatpush.msra.mxu0 %v378
    %405 = vmatmul.f32.gmra.mxu0 %v387
    %v406 = vpop.f32.mrf.mxu0
    %v407 = vadd.f32 %v384, %v406
    %408 = vdwg.mxu0
    %s409 = scalar_lea.vmem [#allocation8], 32
    %v410 = vld [vmem:[%s409] sm:$0xff]
    %v411 = vld [vmem:[%s409 + $0x8] sm:$0xff]
    %v412 = vld [vmem:[%s409 + $0x10] sm:$0xff]
    %v413 = vld [vmem:[%s409 + $0x18] sm:$0xff]
    %s414 = scalar_lea.vmem [#allocation9], 32
    %v415 = vld [vmem:[%s414] sm:$0xff]
    %v416 = vld [vmem:[%s414 + $0x8] sm:$0xff]
    %v417 = vld [vmem:[%s414 + $0x10] sm:$0xff]
    %v418 = vld [vmem:[%s414 + $0x18] sm:$0xff]
    %419 = vmatpush.msra.mxu0 0.0
    %420 = vmatpush.msra.mxu0 0.0
    %421 = vmatpush.msra.mxu0 0.0
    %422 = vmatpush.msra.mxu0 0.0
    %423 = vmatpush.msra.mxu0 0.0
    %424 = vmatpush.msra.mxu0 0.0
    %425 = vmatpush.msra.mxu0 0.0
    %426 = vmatpush.msra.mxu0 0.0
    %427 = vmatpush.msra.mxu0 0.0
    %428 = vmatpush.msra.mxu0 0.0
    %429 = vmatpush.msra.mxu0 0.0
    %430 = vmatpush.msra.mxu0 0.0
    %431 = vmatpush.msra.mxu0 %v418
    %432 = vmatpush.msra.mxu0 %v417
    %433 = vmatpush.msra.mxu0 %v416
    %434 = vmatpush.msra.mxu0 %v415
    %435 = vmatmul.f32.gmra.mxu0 %v328
    %v436 = vpop.f32.mrf.mxu0
    %v437 = vadd.f32 0.0, %v436
    %438 = vdwg.mxu0
    %439 = vmatpush.msra.mxu0 0.0
    %440 = vmatpush.msra.mxu0 0.0
    %441 = vmatpush.msra.mxu0 0.0
    %442 = vmatpush.msra.mxu0 0.0
    %443 = vmatpush.msra.mxu0 0.0
    %444 = vmatpush.msra.mxu0 0.0
    %445 = vmatpush.msra.mxu0 0.0
    %446 = vmatpush.msra.mxu0 0.0
    %447 = vmatpush.msra.mxu0 0.0
    %448 = vmatpush.msra.mxu0 0.0
    %449 = vmatpush.msra.mxu0 0.0
    %450 = vmatpush.msra.mxu0 0.0
    %451 = vmatpush.msra.mxu0 %v413
    %452 = vmatpush.msra.mxu0 %v412
    %453 = vmatpush.msra.mxu0 %v411
    %454 = vmatpush.msra.mxu0 %v410
    %455 = vmatmul.f32.gmra.mxu0 %v351
    %v456 = vpop.f32.mrf.mxu0
    %v457 = vadd.f32 %v437, %v456
    %458 = vdwg.mxu0
    %s459 = scalar_lea.vmem %s10, 1
    %v460 = vld [vmem:[%s459] sm:$0x1]
    %v462 = vperm.slane %v460, 0
    %v464 = vadd.f32 %v457, %v462
    %s465 = scalar_lea.vmem [#allocation11], 32
    %v466 = vld [vmem:[%s465] sm:$0xff]
    %v467 = vld [vmem:[%s465 + $0x8] sm:$0xff]
    %v468 = vld [vmem:[%s465 + $0x10] sm:$0xff]
    %v469 = vld [vmem:[%s465 + $0x18] sm:$0xff]
    %s470 = scalar_lea.vmem %s11, 1
    %v471 = vld [vmem:[%s470] sm:$0x1]
    %v473 = vperm.slane %v471, 0
    %475 = vmatpush.msra.mxu0 0.0
    %476 = vmatpush.msra.mxu0 0.0
    %477 = vmatpush.msra.mxu0 0.0
    %478 = vmatpush.msra.mxu0 0.0
    %479 = vmatpush.msra.mxu0 0.0
    %480 = vmatpush.msra.mxu0 0.0
    %481 = vmatpush.msra.mxu0 0.0
    %482 = vmatpush.msra.mxu0 0.0
    %483 = vmatpush.msra.mxu0 0.0
    %484 = vmatpush.msra.mxu0 0.0
    %485 = vmatpush.msra.mxu0 0.0
    %486 = vmatpush.msra.mxu0 0.0
    %487 = vmatpush.msra.mxu0 %v469
    %488 = vmatpush.msra.mxu0 %v468
    %489 = vmatpush.msra.mxu0 %v467
    %490 = vmatpush.msra.mxu0 %v466
    %491 = vmatmul.f32.gmra.mxu0 %v387
    %v492 = vpop.f32.mrf.mxu0
    %v493 = vadd.f32 %v473, %v492
    %494 = vdwg.mxu0
    %s495 = scalar_lea.vmem [#allocation8], 64
    %v496 = vld [vmem:[%s495] sm:$0xff]
    %v497 = vld [vmem:[%s495 + $0x8] sm:$0xff]
    %v498 = vld [vmem:[%s495 + $0x10] sm:$0xff]
    %v499 = vld [vmem:[%s495 + $0x18] sm:$0xff]
    %s500 = scalar_lea.vmem [#allocation9], 64
    %v501 = vld [vmem:[%s500] sm:$0xff]
    %v502 = vld [vmem:[%s500 + $0x8] sm:$0xff]
    %v503 = vld [vmem:[%s500 + $0x10] sm:$0xff]
    %v504 = vld [vmem:[%s500 + $0x18] sm:$0xff]
    %505 = vmatpush.msra.mxu0 0.0
    %506 = vmatpush.msra.mxu0 0.0
    %507 = vmatpush.msra.mxu0 0.0
    %508 = vmatpush.msra.mxu0 0.0
    %509 = vmatpush.msra.mxu0 0.0
    %510 = vmatpush.msra.mxu0 0.0
    %511 = vmatpush.msra.mxu0 0.0
    %512 = vmatpush.msra.mxu0 0.0
    %513 = vmatpush.msra.mxu0 0.0
    %514 = vmatpush.msra.mxu0 0.0
    %515 = vmatpush.msra.mxu0 0.0
    %516 = vmatpush.msra.mxu0 0.0
    %517 = vmatpush.msra.mxu0 %v504
    %518 = vmatpush.msra.mxu0 %v503
    %519 = vmatpush.msra.mxu0 %v502
    %520 = vmatpush.msra.mxu0 %v501
    %521 = vmatmul.f32.gmra.mxu0 %v328
    %v522 = vpop.f32.mrf.mxu0
    %v523 = vadd.f32 0.0, %v522
    %524 = vdwg.mxu0
    %525 = vmatpush.msra.mxu0 0.0
    %526 = vmatpush.msra.mxu0 0.0
    %527 = vmatpush.msra.mxu0 0.0
    %528 = vmatpush.msra.mxu0 0.0
    %529 = vmatpush.msra.mxu0 0.0
    %530 = vmatpush.msra.mxu0 0.0
    %531 = vmatpush.msra.mxu0 0.0
    %532 = vmatpush.msra.mxu0 0.0
    %533 = vmatpush.msra.mxu0 0.0
    %534 = vmatpush.msra.mxu0 0.0
    %535 = vmatpush.msra.mxu0 0.0
    %536 = vmatpush.msra.mxu0 0.0
    %537 = vmatpush.msra.mxu0 %v499
    %538 = vmatpush.msra.mxu0 %v498
    %539 = vmatpush.msra.mxu0 %v497
    %540 = vmatpush.msra.mxu0 %v496
    %541 = vmatmul.f32.gmra.mxu0 %v351
    %v542 = vpop.f32.mrf.mxu0
    %v543 = vadd.f32 %v523, %v542
    %544 = vdwg.mxu0
    %s545 = scalar_lea.vmem %s10, 2
    %v546 = vld [vmem:[%s545] sm:$0x1]
    %v548 = vperm.slane %v546, 0
    %v550 = vadd.f32 %v543, %v548
    %s551 = scalar_lea.vmem [#allocation11], 64
    %v552 = vld [vmem:[%s551] sm:$0xff]
    %v553 = vld [vmem:[%s551 + $0x8] sm:$0xff]
    %v554 = vld [vmem:[%s551 + $0x10] sm:$0xff]
    %v555 = vld [vmem:[%s551 + $0x18] sm:$0xff]
    %s556 = scalar_lea.vmem %s11, 2
    %v557 = vld [vmem:[%s556] sm:$0x1]
    %v559 = vperm.slane %v557, 0
    %561 = vmatpush.msra.mxu0 0.0
    %562 = vmatpush.msra.mxu0 0.0
    %563 = vmatpush.msra.mxu0 0.0
    %564 = vmatpush.msra.mxu0 0.0
    %565 = vmatpush.msra.mxu0 0.0
    %566 = vmatpush.msra.mxu0 0.0
    %567 = vmatpush.msra.mxu0 0.0
    %568 = vmatpush.msra.mxu0 0.0
    %569 = vmatpush.msra.mxu0 0.0
    %570 = vmatpush.msra.mxu0 0.0
    %571 = vmatpush.msra.mxu0 0.0
    %572 = vmatpush.msra.mxu0 0.0
    %573 = vmatpush.msra.mxu0 %v555
    %574 = vmatpush.msra.mxu0 %v554
    %575 = vmatpush.msra.mxu0 %v553
    %576 = vmatpush.msra.mxu0 %v552
    %577 = vmatmul.f32.gmra.mxu0 %v387
    %v578 = vpop.f32.mrf.mxu0
    %v579 = vadd.f32 %v559, %v578
    %580 = vdwg.mxu0
    %v581 = vadd.f32 %v377, %v407
    %v582 = vxor.u32 %v581, 2147483648
    %v583 = vmul.f32 %v582, 1.442695
    %v584 = vpow.pop %v583
    %v585 = vadd.f32 %v584, 1.0
    %v586 = vrcp.pop %v585
    %v587 = vmul.f32 %v585, %v586
    %v588 = vsub.f32 1.0, %v587
    %v589 = vmul.f32 %v586, %v588
    %v590 = vadd.f32 %v586, %v589
    %vm591 = vweird.f32 %v585
    %vm592 = vweird.f32 %v586
    %vm593 = vmor %vm591, %vm592
    %v594 = vsel %vm593, %v586, %v590
    %v595 = vand.u32 2147483647, %v585
    %vm596 = vcmp.eq.f32.partialorder %v595, 8.507059e+37
    %v597 = vand.u32 %v585, 2147483648
    %v598 = vor.u32 1.1754944e-38, %v597
    %v599 = vsel %vm596, %v598, %v594
    %v600 = vmul.f32 1.0, %v599
    %v601 = vadd.f32 %v464, %v493
    %v602 = vxor.u32 %v601, 2147483648
    %v603 = vmul.f32 %v602, 1.442695
    %v604 = vpow.pop %v603
    %v605 = vadd.f32 %v604, 1.0
    %v606 = vrcp.pop %v605
    %v607 = vmul.f32 %v605, %v606
    %v608 = vsub.f32 1.0, %v607
    %v609 = vmul.f32 %v606, %v608
    %v610 = vadd.f32 %v606, %v609
    %vm611 = vweird.f32 %v605
    %vm612 = vweird.f32 %v606
    %vm613 = vmor %vm611, %vm612
    %v614 = vsel %vm613, %v606, %v610
    %v615 = vand.u32 2147483647, %v605
    %vm616 = vcmp.eq.f32.partialorder %v615, 8.507059e+37
    %v617 = vand.u32 %v605, 2147483648
    %v618 = vor.u32 1.1754944e-38, %v617
    %v619 = vsel %vm616, %v618, %v614
    %v620 = vmul.f32 1.0, %v619
    %v621 = vmul.f32 %v600, %v579
    %v622 = vadd.f32 %v550, %v621
    %v623 = vtanh.pop %v622
    %v624 = vsub.f32 1.0, %v620
    %v625 = vmul.f32 %v624, %v623
    %v626 = vmul.f32 %v620, %v160
    %v627 = vadd.f32 %v625, %v626
    %v628 = vld [vmem:[%s12] sm:$0xff]
    %v629 = vld [vmem:[%s12 + $0x8] sm:$0xff]
    %v630 = vld [vmem:[%s12 + $0x10] sm:$0xff]
    %v631 = vld [vmem:[%s12 + $0x18] sm:$0xff]
    %v632 = vld [vmem:[#allocation12] sm:$0x1]
    %v634 = vperm.slane %v632, 0
    %v637 = vsel %vm176, %v627, 0
    %639 = vmatpush.msra.mxu0 0.0
    %640 = vmatpush.msra.mxu0 0.0
    %641 = vmatpush.msra.mxu0 0.0
    %642 = vmatpush.msra.mxu0 0.0
    %643 = vmatpush.msra.mxu0 0.0
    %644 = vmatpush.msra.mxu0 0.0
    %645 = vmatpush.msra.mxu0 0.0
    %646 = vmatpush.msra.mxu0 0.0
    %647 = vmatpush.msra.mxu0 0.0
    %648 = vmatpush.msra.mxu0 0.0
    %649 = vmatpush.msra.mxu0 0.0
    %650 = vmatpush.msra.mxu0 0.0
    %651 = vmatpush.msra.mxu0 %v631
    %652 = vmatpush.msra.mxu0 %v630
    %653 = vmatpush.msra.mxu0 %v629
    %654 = vmatpush.msra.mxu0 %v628
    %655 = vmatmul.f32.gmra.mxu0 %v637
    %v656 = vpop.f32.mrf.mxu0
    %v657 = vadd.f32 %v634, %v656
    %658 = vdwg.mxu0
    %v659 = vld [vmem:[%s14] sm:$0xff]
    %v660 = vld [vmem:[%s14 + $0x8] sm:$0xff]
    %v661 = vld [vmem:[%s14 + $0x10] sm:$0xff]
    %v662 = vld [vmem:[%s14 + $0x18] sm:$0xff]
    %v663 = vld [vmem:[#allocation14] sm:$0x1]
    %v665 = vperm.slane %v663, 0
    %v668 = vsel %vm176, %v657, 0
    %670 = vmatpush.msra.mxu0 0.0
    %671 = vmatpush.msra.mxu0 0.0
    %672 = vmatpush.msra.mxu0 0.0
    %673 = vmatpush.msra.mxu0 0.0
    %674 = vmatpush.msra.mxu0 0.0
    %675 = vmatpush.msra.mxu0 0.0
    %676 = vmatpush.msra.mxu0 0.0
    %677 = vmatpush.msra.mxu0 0.0
    %678 = vmatpush.msra.mxu0 0.0
    %679 = vmatpush.msra.mxu0 0.0
    %680 = vmatpush.msra.mxu0 0.0
    %681 = vmatpush.msra.mxu0 0.0
    %682 = vmatpush.msra.mxu0 %v662
    %683 = vmatpush.msra.mxu0 %v661
    %684 = vmatpush.msra.mxu0 %v660
    %685 = vmatpush.msra.mxu0 %v659
    %686 = vmatmul.f32.gmra.mxu0 %v668
    %v687 = vpop.f32.mrf.mxu0
    %v688 = vadd.f32 %v665, %v687
    %689 = vdwg.mxu0
    %vm690 = vcmask 123904
    %v691 = vsel %vm690, %v688, -inf
    %692 = vmax.xlane.f32.xlu0 %v691
    %v693 = vpop.xlane.xlu0 %692
    %v694 = vsub.f32 %v688, %v693
    %v695 = vmul.f32 %v694, 1.442695
    %v696 = vpow.pop %v695
    %v697 = vsel %vm690, %v696, 0.0
    %698 = vadd.xlane.f32.xlu0 %v697
    %v699 = vpop.xlane.xlu0 %698
    %v700 = vrcp.pop %v699
    %v701 = vmul.f32 %v699, %v700
    %v702 = vsub.f32 1.0, %v701
    %v703 = vmul.f32 %v700, %v702
    %v704 = vadd.f32 %v700, %v703
    %vm705 = vweird.f32 %v699
    %vm706 = vweird.f32 %v700
    %vm707 = vmor %vm705, %vm706
    %v708 = vsel %vm707, %v700, %v704
    %v709 = vand.u32 2147483647, %v699
    %vm710 = vcmp.eq.f32.partialorder %v709, 8.507059e+37
    %v711 = vand.u32 %v699, 2147483648
    %v712 = vor.u32 1.1754944e-38, %v711
    %v713 = vsel %vm710, %v712, %v708
    %v714 = vmul.f32 %v696, %v713
    %715 = vst.msk [vmem:[#allocation15] sm:$0x3] %vm690, %v714
    // Predicated region
    $region94: #{_lambda_.1} parent=1 // pred_check
      _
    $region95: #{_lambda_.1} parent=1 // pred_check_branch
      %717 = sbr.rel (0) target = $region97
    $region96: #{_lambda_.1} parent=1 // pred_region
      %719 = vsyncadd [#allocation5], 0
      %s721 = sshll.u32 [#allocation15], 4
      %s722 = int_to_ptr.vmem [resolvable:$true] %s721
      %s723 = sshll.u32 %s16, 4
      %s724 = int_to_ptr.hbm [resolvable:$true] %s723
      %726 = dma.vmem_to_hbm [thread:$0]  %s722, 32, %s724, [#allocation5]
    $region97: #{_lambda_.1} parent=1 // pred_fallthru
      _
    // Predicated region
    $region98: #{_lambda_.1} parent=1 // pred_check
      _
    $region99: #{_lambda_.1} parent=1 // pred_check_branch
      %728 = sbr.rel (0) target = $region101
    $region100: #{_lambda_.1} parent=1 // pred_region
      %730 = vsyncadd [#allocation17], 0
      %s732 = sshll.u32 [#allocation16], 4
      %s733 = int_to_ptr.vmem [resolvable:$true] %s732
      %s734 = sshll.u32 %s17, 4
      %s735 = int_to_ptr.hbm [resolvable:$true] %s734
      %737 = dma.vmem_to_hbm [thread:$0]  %s733, 32, %s735, [#allocation17]
    $region101: #{_lambda_.1} parent=1 // pred_fallthru
      _
    // Predicated region
    $region102: #{_lambda_.1} parent=1 // pred_check
      _
    $region103: #{_lambda_.1} parent=1 // pred_check_branch
      %739 = sbr.rel (0) target = $region105
    $region104: #{_lambda_.1} parent=1 // pred_region
      %741 = dma.done [#allocation5], 32
    $region105: #{_lambda_.1} parent=1 // pred_fallthru
      _
    // Predicated region
    $region106: #{_lambda_.1} parent=1 // pred_check
      _
    $region107: #{_lambda_.1} parent=1 // pred_check_branch
      %743 = sbr.rel (0) target = $region109
    $region108: #{_lambda_.1} parent=1 // pred_region
      %745 = dma.done [#allocation17], 32
    $region109: #{_lambda_.1} parent=1 // pred_fallthru
      _
    %746 = vsyncpa [#allocation4], 1
    %747 = vsyncpa [#allocation7], 1
    %748 = vsyncpa [#allocation10], 1
    %749 = vsyncpa [#allocation13], 1
    %750 = vsyncpa [#allocation5], 1
    %751 = vsyncpa [#allocation17], 1

</llo_original>
